<compile_context>
chip_gen: v5e
topology: v5e:2x2
jax: 0.10.0
libtpu: 0.0.40
codegen_flags: <defaults>
</compile_context>

<pallas_src>
import math

import jax
import jax.numpy as jnp
import numpy as np
from jax.experimental import pallas as pl

# ---- small config consistent with the module ----
B = 2            # batch
S = 8            # sequence length
H = 32           # hidden_size
NH = 4           # num_attention_heads
HD = H // NH     # attention_head_size


# ---------- kernel: BERTSelfAttention ----------
def self_attention_kernel(x_ref, mask_ref, wq_ref, bq_ref, wk_ref, bk_ref,
                          wv_ref, bv_ref, out_ref):
    scale = 1.0 / math.sqrt(HD)

    # Fold batch into the sublane axis: (B, S, H) -> (B*S, H) (layout no-op).
    x2 = x_ref[...].reshape(B * S, H)

    # One MXU push each for Q/K/V over all B*S rows; fold 1/sqrt(HD) into Q
    # (equivalent to scaling the scores, since K is untouched).
    q = (jnp.dot(x2, wq_ref[...], preferred_element_type=jnp.float32)
         + bq_ref[...]) * scale
    k = jnp.dot(x2, wk_ref[...], preferred_element_type=jnp.float32) + bk_ref[...]
    v = jnp.dot(x2, wv_ref[...], preferred_element_type=jnp.float32) + bv_ref[...]

    q3 = q.reshape(B, S, H)
    k3 = k.reshape(B, S, H)
    v3 = v.reshape(B, S, H)
    mask = mask_ref[...]                       # (B, 1, S) additive mask

    ctx_heads = []
    for h in range(NH):                        # static loop, NH = 4
        lo = h * HD
        qh = q3[:, :, lo:lo + HD]              # (B, S, HD)
        kh = k3[:, :, lo:lo + HD]
        vh = v3[:, :, lo:lo + HD]

        # Batched over B; contraction on the head dim (no explicit transpose).
        s = jnp.einsum('bqd,bkd->bqk', qh, kh,
                       preferred_element_type=jnp.float32)     # (B, S, S)
        s = s + mask                                           # broadcast over q rows

        # numerically-stable softmax; divide via EUP approximate reciprocal
        m = jnp.max(s, axis=-1, keepdims=True)
        p = jnp.exp(s - m)
        denom = jnp.sum(p, axis=-1, keepdims=True)
        p = p * pl.reciprocal(denom, approx=True)
        # TODO(synk): attention_probs dropout omitted (eval mode / identity).

        ctx_heads.append(jnp.einsum('bqk,bkd->bqd', p, vh,
                                    preferred_element_type=jnp.float32))

    # Concatenate heads along lanes -> single lane-dense (B, S, H) store.
    out_ref[...] = jnp.concatenate(ctx_heads, axis=-1)


# ---------- wrapper ----------
def bert_self_attention(x, mask, p):
    # No grid: the whole (tiny) problem is one kernel invocation with every
    # operand resident in VMEM (well under any VMEM limit at these sizes).
    return pl.pallas_call(
        self_attention_kernel,
        out_shape=jax.ShapeDtypeStruct((B, S, H), jnp.float32),
    )(x, mask, p["wq"], p["bq"], p["wk"], p["bk"], p["wv"], p["bv"])


# ---------- pure-JAX reference (mirrors the PyTorch module) ----------
def reference_self_attention(x, mask, p):
    q = x @ p["wq"] + p["bq"]
    k = x @ p["wk"] + p["bk"]
    v = x @ p["wv"] + p["bv"]
    q = q.reshape(B, S, NH, HD).transpose(0, 2, 1, 3)
    k = k.reshape(B, S, NH, HD).transpose(0, 2, 1, 3)
    v = v.reshape(B, S, NH, HD).transpose(0, 2, 1, 3)
    scores = (q @ k.transpose(0, 1, 3, 2)) / math.sqrt(HD)
    scores = scores + mask[:, None, :, :]              # (B,1,1,S) broadcast
    probs = jax.nn.softmax(scores, axis=-1)
    ctx = (probs @ v).transpose(0, 2, 1, 3).reshape(B, S, H)
    return ctx


# ---------- main ----------
if __name__ == "__main__":
    key = jax.random.PRNGKey(0)
    keys = jax.random.split(key, 10)

    def init(k, shape, scale=0.02):
        return scale * jax.random.normal(k, shape, jnp.float32)

    params = {
        "wq": init(keys[0], (H, H)), "bq": init(keys[1], (1, H)),
        "wk": init(keys[2], (H, H)), "bk": init(keys[3], (1, H)),
        "wv": init(keys[4], (H, H)), "bv": init(keys[5], (1, H)),
    }

    x = jax.random.normal(keys[6], (B, S, H), jnp.float32)

    # additive attention mask: batch 0 fully visible, batch 1 masks last 2 tokens
    valid = jnp.array([[1.0] * S,
                       [1.0] * (S - 2) + [0.0] * 2], jnp.float32)   # (B, S)
    mask = ((1.0 - valid) * -10000.0).reshape(B, 1, S)

    out = jax.block_until_ready(bert_self_attention(x, mask, params))

    ref = reference_self_attention(x, mask, params)
    np.testing.assert_allclose(np.asarray(out), np.asarray(ref),
                               rtol=2e-3, atol=2e-4)

    print("KERNEL_OK")
</pallas_src>

<mosaic_0001>
module attributes {stable_mosaic.version = 11 : i64} {
  func.func @self_attention_kernel(%arg0: memref<2x8x32xf32, #tpu.memory_space<vmem>>, %arg1: memref<2x1x8xf32, #tpu.memory_space<vmem>>, %arg2: memref<32x32xf32, #tpu.memory_space<vmem>>, %arg3: memref<1x32xf32, #tpu.memory_space<vmem>>, %arg4: memref<32x32xf32, #tpu.memory_space<vmem>>, %arg5: memref<1x32xf32, #tpu.memory_space<vmem>>, %arg6: memref<32x32xf32, #tpu.memory_space<vmem>>, %arg7: memref<1x32xf32, #tpu.memory_space<vmem>>, %arg8: memref<2x8x32xf32, #tpu.memory_space<vmem>>) attributes {dimension_semantics = [], scalar_prefetch = 0 : i64, scratch_operands = 0 : i64, tpu.core_type = #tpu.core_type<tc>} {
    %c0 = arith.constant 0 : index
    %c0_0 = arith.constant 0 : index
    %c0_1 = arith.constant 0 : index
    %0 = vector.load %arg0[%c0, %c0_0, %c0_1] : memref<2x8x32xf32, #tpu.memory_space<vmem>>, vector<2x8x32xf32>
    %1 = vector.shape_cast %0 : vector<2x8x32xf32> to vector<16x32xf32>
    %c0_2 = arith.constant 0 : index
    %c0_3 = arith.constant 0 : index
    %2 = vector.load %arg2[%c0_2, %c0_3] : memref<32x32xf32, #tpu.memory_space<vmem>>, vector<32x32xf32>
    %cst = arith.constant dense<0.000000e+00> : vector<16x32xf32>
    %3 = tpu.matmul %1, %2, %cst {dimension_numbers = #tpu.dot_dimension_numbers<[1], [0], [0], [1], [0, 0, 1, 1], [], []>} : vector<16x32xf32>, vector<32x32xf32>, vector<16x32xf32> -> vector<16x32xf32>
    %c0_4 = arith.constant 0 : index
    %c0_5 = arith.constant 0 : index
    %4 = vector.load %arg3[%c0_4, %c0_5] : memref<1x32xf32, #tpu.memory_space<vmem>>, vector<1x32xf32>
    %5 = vector.broadcast %4 : vector<1x32xf32> to vector<16x32xf32>
    %6 = arith.addf %3, %5 : vector<16x32xf32>
    %cst_6 = arith.constant 0.353553385 : f32
    %7 = vector.broadcast %cst_6 : f32 to vector<16x32xf32>
    %8 = arith.mulf %6, %7 : vector<16x32xf32>
    %c0_7 = arith.constant 0 : index
    %c0_8 = arith.constant 0 : index
    %9 = vector.load %arg4[%c0_7, %c0_8] : memref<32x32xf32, #tpu.memory_space<vmem>>, vector<32x32xf32>
    %cst_9 = arith.constant dense<0.000000e+00> : vector<16x32xf32>
    %10 = tpu.matmul %1, %9, %cst_9 {dimension_numbers = #tpu.dot_dimension_numbers<[1], [0], [0], [1], [0, 0, 1, 1], [], []>} : vector<16x32xf32>, vector<32x32xf32>, vector<16x32xf32> -> vector<16x32xf32>
    %c0_10 = arith.constant 0 : index
    %c0_11 = arith.constant 0 : index
    %11 = vector.load %arg5[%c0_10, %c0_11] : memref<1x32xf32, #tpu.memory_space<vmem>>, vector<1x32xf32>
    %12 = vector.broadcast %11 : vector<1x32xf32> to vector<16x32xf32>
    %13 = arith.addf %10, %12 : vector<16x32xf32>
    %c0_12 = arith.constant 0 : index
    %c0_13 = arith.constant 0 : index
    %14 = vector.load %arg6[%c0_12, %c0_13] : memref<32x32xf32, #tpu.memory_space<vmem>>, vector<32x32xf32>
    %cst_14 = arith.constant dense<0.000000e+00> : vector<16x32xf32>
    %15 = tpu.matmul %1, %14, %cst_14 {dimension_numbers = #tpu.dot_dimension_numbers<[1], [0], [0], [1], [0, 0, 1, 1], [], []>} : vector<16x32xf32>, vector<32x32xf32>, vector<16x32xf32> -> vector<16x32xf32>
    %c0_15 = arith.constant 0 : index
    %c0_16 = arith.constant 0 : index
    %16 = vector.load %arg7[%c0_15, %c0_16] : memref<1x32xf32, #tpu.memory_space<vmem>>, vector<1x32xf32>
    %17 = vector.broadcast %16 : vector<1x32xf32> to vector<16x32xf32>
    %18 = arith.addf %15, %17 : vector<16x32xf32>
    %19 = vector.shape_cast %8 : vector<16x32xf32> to vector<2x8x32xf32>
    %20 = vector.shape_cast %13 : vector<16x32xf32> to vector<2x8x32xf32>
    %21 = vector.shape_cast %18 : vector<16x32xf32> to vector<2x8x32xf32>
    %c0_17 = arith.constant 0 : index
    %c0_18 = arith.constant 0 : index
    %c0_19 = arith.constant 0 : index
    %22 = vector.load %arg1[%c0_17, %c0_18, %c0_19] : memref<2x1x8xf32, #tpu.memory_space<vmem>>, vector<2x1x8xf32>
    %23 = vector.extract_strided_slice %19 {offsets = [0, 0, 0], sizes = [2, 8, 8], strides = [1, 1, 1]} : vector<2x8x32xf32> to vector<2x8x8xf32>
    %24 = vector.extract_strided_slice %20 {offsets = [0, 0, 0], sizes = [2, 8, 8], strides = [1, 1, 1]} : vector<2x8x32xf32> to vector<2x8x8xf32>
    %25 = vector.extract_strided_slice %21 {offsets = [0, 0, 0], sizes = [2, 8, 8], strides = [1, 1, 1]} : vector<2x8x32xf32> to vector<2x8x8xf32>
    "tpu.trace_start"() <{level = 10 : i32, message = "bqd,bkd->bqk"}> : () -> ()
    %cst_20 = arith.constant dense<0.000000e+00> : vector<2x8x8xf32>
    %26 = tpu.matmul %23, %24, %cst_20 {dimension_numbers = #tpu.dot_dimension_numbers<[2], [2], [1], [1], [0, 0, 0, 1, 1, 1], [0], [0]>} : vector<2x8x8xf32>, vector<2x8x8xf32>, vector<2x8x8xf32> -> vector<2x8x8xf32>
    "tpu.trace_stop"() : () -> ()
    %27 = vector.broadcast %22 : vector<2x1x8xf32> to vector<2x8x8xf32>
    %28 = arith.addf %26, %27 : vector<2x8x8xf32>
    %cst_21 = arith.constant dense<0xFF800000> : vector<2x8xf32>
    %29 = vector.multi_reduction <maximumf>, %28, %cst_21 [2] : vector<2x8x8xf32> to vector<2x8xf32>
    %30 = vector.shape_cast %29 : vector<2x8xf32> to vector<2x8x1xf32>
    %31 = vector.broadcast %30 : vector<2x8x1xf32> to vector<2x8x8xf32>
    %32 = arith.subf %28, %31 : vector<2x8x8xf32>
    %33 = math.exp %32 : vector<2x8x8xf32>
    %cst_22 = arith.constant dense<0.000000e+00> : vector<2x8xf32>
    %34 = vector.multi_reduction <add>, %33, %cst_22 [2] : vector<2x8x8xf32> to vector<2x8xf32>
    %35 = vector.shape_cast %34 : vector<2x8xf32> to vector<2x8x1xf32>
    %36 = tpu.reciprocal %35 {approx = true} : vector<2x8x1xf32> -> vector<2x8x1xf32>
    %37 = vector.broadcast %36 : vector<2x8x1xf32> to vector<2x8x8xf32>
    %38 = arith.mulf %33, %37 : vector<2x8x8xf32>
    "tpu.trace_start"() <{level = 10 : i32, message = "bqk,bkd->bqd"}> : () -> ()
    %cst_23 = arith.constant dense<0.000000e+00> : vector<2x8x8xf32>
    %39 = tpu.matmul %38, %25, %cst_23 {dimension_numbers = #tpu.dot_dimension_numbers<[2], [1], [1], [2], [0, 0, 0, 1, 1, 2], [0], [0]>} : vector<2x8x8xf32>, vector<2x8x8xf32>, vector<2x8x8xf32> -> vector<2x8x8xf32>
    "tpu.trace_stop"() : () -> ()
    %40 = vector.extract_strided_slice %19 {offsets = [0, 0, 8], sizes = [2, 8, 8], strides = [1, 1, 1]} : vector<2x8x32xf32> to vector<2x8x8xf32>
    %41 = vector.extract_strided_slice %20 {offsets = [0, 0, 8], sizes = [2, 8, 8], strides = [1, 1, 1]} : vector<2x8x32xf32> to vector<2x8x8xf32>
    %42 = vector.extract_strided_slice %21 {offsets = [0, 0, 8], sizes = [2, 8, 8], strides = [1, 1, 1]} : vector<2x8x32xf32> to vector<2x8x8xf32>
    "tpu.trace_start"() <{level = 10 : i32, message = "bqd,bkd->bqk"}> : () -> ()
    %cst_24 = arith.constant dense<0.000000e+00> : vector<2x8x8xf32>
    %43 = tpu.matmul %40, %41, %cst_24 {dimension_numbers = #tpu.dot_dimension_numbers<[2], [2], [1], [1], [0, 0, 0, 1, 1, 1], [0], [0]>} : vector<2x8x8xf32>, vector<2x8x8xf32>, vector<2x8x8xf32> -> vector<2x8x8xf32>
    "tpu.trace_stop"() : () -> ()
    %44 = vector.broadcast %22 : vector<2x1x8xf32> to vector<2x8x8xf32>
    %45 = arith.addf %43, %44 : vector<2x8x8xf32>
    %cst_25 = arith.constant dense<0xFF800000> : vector<2x8xf32>
    %46 = vector.multi_reduction <maximumf>, %45, %cst_25 [2] : vector<2x8x8xf32> to vector<2x8xf32>
    %47 = vector.shape_cast %46 : vector<2x8xf32> to vector<2x8x1xf32>
    %48 = vector.broadcast %47 : vector<2x8x1xf32> to vector<2x8x8xf32>
    %49 = arith.subf %45, %48 : vector<2x8x8xf32>
    %50 = math.exp %49 : vector<2x8x8xf32>
    %cst_26 = arith.constant dense<0.000000e+00> : vector<2x8xf32>
    %51 = vector.multi_reduction <add>, %50, %cst_26 [2] : vector<2x8x8xf32> to vector<2x8xf32>
    %52 = vector.shape_cast %51 : vector<2x8xf32> to vector<2x8x1xf32>
    %53 = tpu.reciprocal %52 {approx = true} : vector<2x8x1xf32> -> vector<2x8x1xf32>
    %54 = vector.broadcast %53 : vector<2x8x1xf32> to vector<2x8x8xf32>
    %55 = arith.mulf %50, %54 : vector<2x8x8xf32>
    "tpu.trace_start"() <{level = 10 : i32, message = "bqk,bkd->bqd"}> : () -> ()
    %cst_27 = arith.constant dense<0.000000e+00> : vector<2x8x8xf32>
    %56 = tpu.matmul %55, %42, %cst_27 {dimension_numbers = #tpu.dot_dimension_numbers<[2], [1], [1], [2], [0, 0, 0, 1, 1, 2], [0], [0]>} : vector<2x8x8xf32>, vector<2x8x8xf32>, vector<2x8x8xf32> -> vector<2x8x8xf32>
    "tpu.trace_stop"() : () -> ()
    %57 = vector.extract_strided_slice %19 {offsets = [0, 0, 16], sizes = [2, 8, 8], strides = [1, 1, 1]} : vector<2x8x32xf32> to vector<2x8x8xf32>
    %58 = vector.extract_strided_slice %20 {offsets = [0, 0, 16], sizes = [2, 8, 8], strides = [1, 1, 1]} : vector<2x8x32xf32> to vector<2x8x8xf32>
    %59 = vector.extract_strided_slice %21 {offsets = [0, 0, 16], sizes = [2, 8, 8], strides = [1, 1, 1]} : vector<2x8x32xf32> to vector<2x8x8xf32>
    "tpu.trace_start"() <{level = 10 : i32, message = "bqd,bkd->bqk"}> : () -> ()
    %cst_28 = arith.constant dense<0.000000e+00> : vector<2x8x8xf32>
    %60 = tpu.matmul %57, %58, %cst_28 {dimension_numbers = #tpu.dot_dimension_numbers<[2], [2], [1], [1], [0, 0, 0, 1, 1, 1], [0], [0]>} : vector<2x8x8xf32>, vector<2x8x8xf32>, vector<2x8x8xf32> -> vector<2x8x8xf32>
    "tpu.trace_stop"() : () -> ()
    %61 = vector.broadcast %22 : vector<2x1x8xf32> to vector<2x8x8xf32>
    %62 = arith.addf %60, %61 : vector<2x8x8xf32>
    %cst_29 = arith.constant dense<0xFF800000> : vector<2x8xf32>
    %63 = vector.multi_reduction <maximumf>, %62, %cst_29 [2] : vector<2x8x8xf32> to vector<2x8xf32>
    %64 = vector.shape_cast %63 : vector<2x8xf32> to vector<2x8x1xf32>
    %65 = vector.broadcast %64 : vector<2x8x1xf32> to vector<2x8x8xf32>
    %66 = arith.subf %62, %65 : vector<2x8x8xf32>
    %67 = math.exp %66 : vector<2x8x8xf32>
    %cst_30 = arith.constant dense<0.000000e+00> : vector<2x8xf32>
    %68 = vector.multi_reduction <add>, %67, %cst_30 [2] : vector<2x8x8xf32> to vector<2x8xf32>
    %69 = vector.shape_cast %68 : vector<2x8xf32> to vector<2x8x1xf32>
    %70 = tpu.reciprocal %69 {approx = true} : vector<2x8x1xf32> -> vector<2x8x1xf32>
    %71 = vector.broadcast %70 : vector<2x8x1xf32> to vector<2x8x8xf32>
    %72 = arith.mulf %67, %71 : vector<2x8x8xf32>
    "tpu.trace_start"() <{level = 10 : i32, message = "bqk,bkd->bqd"}> : () -> ()
    %cst_31 = arith.constant dense<0.000000e+00> : vector<2x8x8xf32>
    %73 = tpu.matmul %72, %59, %cst_31 {dimension_numbers = #tpu.dot_dimension_numbers<[2], [1], [1], [2], [0, 0, 0, 1, 1, 2], [0], [0]>} : vector<2x8x8xf32>, vector<2x8x8xf32>, vector<2x8x8xf32> -> vector<2x8x8xf32>
    "tpu.trace_stop"() : () -> ()
    %74 = vector.extract_strided_slice %19 {offsets = [0, 0, 24], sizes = [2, 8, 8], strides = [1, 1, 1]} : vector<2x8x32xf32> to vector<2x8x8xf32>
    %75 = vector.extract_strided_slice %20 {offsets = [0, 0, 24], sizes = [2, 8, 8], strides = [1, 1, 1]} : vector<2x8x32xf32> to vector<2x8x8xf32>
    %76 = vector.extract_strided_slice %21 {offsets = [0, 0, 24], sizes = [2, 8, 8], strides = [1, 1, 1]} : vector<2x8x32xf32> to vector<2x8x8xf32>
    "tpu.trace_start"() <{level = 10 : i32, message = "bqd,bkd->bqk"}> : () -> ()
    %cst_32 = arith.constant dense<0.000000e+00> : vector<2x8x8xf32>
    %77 = tpu.matmul %74, %75, %cst_32 {dimension_numbers = #tpu.dot_dimension_numbers<[2], [2], [1], [1], [0, 0, 0, 1, 1, 1], [0], [0]>} : vector<2x8x8xf32>, vector<2x8x8xf32>, vector<2x8x8xf32> -> vector<2x8x8xf32>
    "tpu.trace_stop"() : () -> ()
    %78 = vector.broadcast %22 : vector<2x1x8xf32> to vector<2x8x8xf32>
    %79 = arith.addf %77, %78 : vector<2x8x8xf32>
    %cst_33 = arith.constant dense<0xFF800000> : vector<2x8xf32>
    %80 = vector.multi_reduction <maximumf>, %79, %cst_33 [2] : vector<2x8x8xf32> to vector<2x8xf32>
    %81 = vector.shape_cast %80 : vector<2x8xf32> to vector<2x8x1xf32>
    %82 = vector.broadcast %81 : vector<2x8x1xf32> to vector<2x8x8xf32>
    %83 = arith.subf %79, %82 : vector<2x8x8xf32>
    %84 = math.exp %83 : vector<2x8x8xf32>
    %cst_34 = arith.constant dense<0.000000e+00> : vector<2x8xf32>
    %85 = vector.multi_reduction <add>, %84, %cst_34 [2] : vector<2x8x8xf32> to vector<2x8xf32>
    %86 = vector.shape_cast %85 : vector<2x8xf32> to vector<2x8x1xf32>
    %87 = tpu.reciprocal %86 {approx = true} : vector<2x8x1xf32> -> vector<2x8x1xf32>
    %88 = vector.broadcast %87 : vector<2x8x1xf32> to vector<2x8x8xf32>
    %89 = arith.mulf %84, %88 : vector<2x8x8xf32>
    "tpu.trace_start"() <{level = 10 : i32, message = "bqk,bkd->bqd"}> : () -> ()
    %cst_35 = arith.constant dense<0.000000e+00> : vector<2x8x8xf32>
    %90 = tpu.matmul %89, %76, %cst_35 {dimension_numbers = #tpu.dot_dimension_numbers<[2], [1], [1], [2], [0, 0, 0, 1, 1, 2], [0], [0]>} : vector<2x8x8xf32>, vector<2x8x8xf32>, vector<2x8x8xf32> -> vector<2x8x8xf32>
    "tpu.trace_stop"() : () -> ()
    %91 = tpu.concatenate %39, %56, %73, %90 in 2 : vector<2x8x8xf32>, vector<2x8x8xf32>, vector<2x8x8xf32>, vector<2x8x8xf32> -> vector<2x8x32xf32>
    %c0_36 = arith.constant 0 : index
    %c0_37 = arith.constant 0 : index
    %c0_38 = arith.constant 0 : index
    %92 = vector.load %arg8[%c0_36, %c0_37, %c0_38] : memref<2x8x32xf32, #tpu.memory_space<vmem>>, vector<2x8x32xf32>
    tpu.vector_store %arg8[%c0_36, %c0_37, %c0_38], %91 {strides = array<i32>} : memref<2x8x32xf32, #tpu.memory_space<vmem>>, vector<2x8x32xf32>,
    return
  }
}

</mosaic_0001>

<llo_original>
// kernel: tpu_custom_call.1
$region0: #{tpu_custom_call.1}
  #allocation0 [shape = 'u32[]', space=smem, size = 0x4, offset = 0x4, fixed_abs, tag = 'smem constant byte address 0x4 - core index']
  #allocation1 [shape = 'u32[72,128]{1,0:T(1,128)}', space=vmem, size = 0x9000, scoped, tag = 'internal scratch']
  %s0 = inlined_call_operand.hbm [shape: f32[2,8,32], index: 0, kind: input, shape index: {}]
  %s1 = inlined_call_operand.hbm [shape: f32[2,1,8], index: 1, kind: input, shape index: {}]
  %s2 = inlined_call_operand.hbm [shape: f32[32,32], index: 2, kind: input, shape index: {}]
  %s3 = inlined_call_operand.vmem [shape: f32[1,32], index: 3, kind: input, shape index: {}]
  %s4 = inlined_call_operand.hbm [shape: f32[32,32], index: 4, kind: input, shape index: {}]
  %s5 = inlined_call_operand.vmem [shape: f32[1,32], index: 5, kind: input, shape index: {}]
  %s6 = inlined_call_operand.hbm [shape: f32[32,32], index: 6, kind: input, shape index: {}]
  %s7 = inlined_call_operand.vmem [shape: f32[1,32], index: 7, kind: input, shape index: {}]
  %s8 = inlined_call_operand.hbm [shape: f32[2,8,32], index: 8, kind: output, shape index: {}]
  %s9 = sld [smem:[#allocation0]]
  $region62: #{tpu_custom_call.1} parent=0
    _
  %s11 = ssub.s32 1, %s9
  %s12 = scalar_select 0, %s11, %s9
  $region1: #{tpu_custom_call.1} parent=0
    #allocation2 [shape = 'u8[8192]{0}', space=vmem, size = 0x2000, scoped, tag = 'input window, operand 0, single buffered']
    #allocation3 [shape = 's32[1]{0}', space=sflag, size = 0x4, scoped, tag = 'scoped memory for tpu_custom_call.1']
    #allocation4 [shape = 's32[1]{0}', space=sflag, size = 0x4, scoped, tag = 'scoped memory for tpu_custom_call.1']
    #allocation5 [shape = 'u8[1024]{0}', space=vmem, size = 0x400, scoped, tag = 'input window, operand 1, single buffered']
    #allocation6 [shape = 's32[1]{0}', space=sflag, size = 0x4, scoped, tag = 'scoped memory for tpu_custom_call.1']
    #allocation7 [shape = 'u8[16384]{0}', space=vmem, size = 0x4000, scoped, tag = 'input window, operand 2, single buffered']
    #allocation8 [shape = 'u8[16384]{0}', space=vmem, size = 0x4000, scoped, tag = 'input window, operand 4, single buffered']
    #allocation9 [shape = 's32[1]{0}', space=sflag, size = 0x4, scoped, tag = 'scoped memory for tpu_custom_call.1']
    #allocation10 [shape = 'u8[16384]{0}', space=vmem, size = 0x4000, scoped, tag = 'input window, operand 6, single buffered']
    #allocation11 [shape = 'u8[8192]{0}', space=vmem, size = 0x2000, scoped, tag = 'output window, operand 0, single buffered']
    %13 = vsyncpa [#allocation3], 0
    %14 = vsyncpa [#allocation6], 0
    %15 = vsyncpa [#allocation9], 0
    %16 = vsyncpa [#allocation4], 0
    // Predicated region
    $region2: #{tpu_custom_call.1} parent=1 // pred_check
      _
    $region3: #{tpu_custom_call.1} parent=1 // pred_check_branch
      %18 = sbr.rel (0) target = $region5
    $region4: #{tpu_custom_call.1} parent=1 // pred_region
      %20 = vsyncadd [#allocation3], 0
      %s21 = sshll.u32 %s0, 4
      %s22 = int_to_ptr.hbm [resolvable:$true] %s21
      %s23 = sshll.u32 [#allocation2], 4
      %s24 = int_to_ptr.vmem [resolvable:$true] %s23
      %29 = dma.hbm_to_vmem [thread:$0]  %s22, 256, %s24, [#allocation3], 128, 128, 8
    $region5: #{tpu_custom_call.1} parent=1 // pred_fallthru
      _
    // Predicated region
    $region6: #{tpu_custom_call.1} parent=1 // pred_check
      _
    $region7: #{tpu_custom_call.1} parent=1 // pred_check_branch
      %31 = sbr.rel (0) target = $region9
    $region8: #{tpu_custom_call.1} parent=1 // pred_region
      %33 = vsyncadd [#allocation6], 0
      %s34 = sshll.u32 %s1, 4
      %s35 = int_to_ptr.hbm [resolvable:$true] %s34
      %s36 = sshll.u32 [#allocation5], 4
      %s37 = int_to_ptr.vmem [resolvable:$true] %s36
      %42 = dma.hbm_to_vmem [thread:$0]  %s35, 32, %s37, [#allocation6], 16, 16, 1
    $region9: #{tpu_custom_call.1} parent=1 // pred_fallthru
      _
    // Predicated region
    $region10: #{tpu_custom_call.1} parent=1 // pred_check
      _
    $region11: #{tpu_custom_call.1} parent=1 // pred_check_branch
      %44 = sbr.rel (0) target = $region13
    $region12: #{tpu_custom_call.1} parent=1 // pred_region
      %46 = vsyncadd [#allocation6], 0
      %s47 = sshll.u32 %s2, 4
      %s48 = int_to_ptr.hbm [resolvable:$true] %s47
      %s49 = sshll.u32 [#allocation7], 4
      %s50 = int_to_ptr.vmem [resolvable:$true] %s49
      %55 = dma.hbm_to_vmem [thread:$0]  %s48, 512, %s50, [#allocation6], 128, 128, 8
    $region13: #{tpu_custom_call.1} parent=1 // pred_fallthru
      _
    // Predicated region
    $region14: #{tpu_custom_call.1} parent=1 // pred_check
      _
    $region15: #{tpu_custom_call.1} parent=1 // pred_check_branch
      %57 = sbr.rel (0) target = $region17
    $region16: #{tpu_custom_call.1} parent=1 // pred_region
      _
    $region17: #{tpu_custom_call.1} parent=1 // pred_fallthru
      _
    // Predicated region
    $region18: #{tpu_custom_call.1} parent=1 // pred_check
      _
    $region19: #{tpu_custom_call.1} parent=1 // pred_check_branch
      %59 = sbr.rel (0) target = $region21
    $region20: #{tpu_custom_call.1} parent=1 // pred_region
      %61 = vsyncadd [#allocation9], 0
      %s62 = sshll.u32 %s4, 4
      %s63 = int_to_ptr.hbm [resolvable:$true] %s62
      %s64 = sshll.u32 [#allocation8], 4
      %s65 = int_to_ptr.vmem [resolvable:$true] %s64
      %70 = dma.hbm_to_vmem [thread:$0]  %s63, 512, %s65, [#allocation9], 128, 128, 8
    $region21: #{tpu_custom_call.1} parent=1 // pred_fallthru
      _
    // Predicated region
    $region22: #{tpu_custom_call.1} parent=1 // pred_check
      _
    $region23: #{tpu_custom_call.1} parent=1 // pred_check_branch
      %72 = sbr.rel (0) target = $region25
    $region24: #{tpu_custom_call.1} parent=1 // pred_region
      _
    $region25: #{tpu_custom_call.1} parent=1 // pred_fallthru
      _
    // Predicated region
    $region26: #{tpu_custom_call.1} parent=1 // pred_check
      _
    $region27: #{tpu_custom_call.1} parent=1 // pred_check_branch
      %74 = sbr.rel (0) target = $region29
    $region28: #{tpu_custom_call.1} parent=1 // pred_region
      %76 = vsyncadd [#allocation9], 0
      %s77 = sshll.u32 %s6, 4
      %s78 = int_to_ptr.hbm [resolvable:$true] %s77
      %s79 = sshll.u32 [#allocation10], 4
      %s80 = int_to_ptr.vmem [resolvable:$true] %s79
      %85 = dma.hbm_to_vmem [thread:$0]  %s78, 512, %s80, [#allocation9], 128, 128, 8
    $region29: #{tpu_custom_call.1} parent=1 // pred_fallthru
      _
    // Predicated region
    $region30: #{tpu_custom_call.1} parent=1 // pred_check
      _
    $region31: #{tpu_custom_call.1} parent=1 // pred_check_branch
      %87 = sbr.rel (0) target = $region33
    $region32: #{tpu_custom_call.1} parent=1 // pred_region
      _
    $region33: #{tpu_custom_call.1} parent=1 // pred_fallthru
      _
    // Predicated region
    $region34: #{tpu_custom_call.1} parent=1 // pred_check
      _
    $region35: #{tpu_custom_call.1} parent=1 // pred_check_branch
      %89 = sbr.rel (0) target = $region37
    $region36: #{tpu_custom_call.1} parent=1 // pred_region
      %91 = dma.done [#allocation3], 256
    $region37: #{tpu_custom_call.1} parent=1 // pred_fallthru
      _
    // Predicated region
    $region38: #{tpu_custom_call.1} parent=1 // pred_check
      _
    $region39: #{tpu_custom_call.1} parent=1 // pred_check_branch
      %93 = sbr.rel (0) target = $region41
    $region40: #{tpu_custom_call.1} parent=1 // pred_region
      %95 = dma.done [#allocation6], 32
    $region41: #{tpu_custom_call.1} parent=1 // pred_fallthru
      _
    // Predicated region
    $region42: #{tpu_custom_call.1} parent=1 // pred_check
      _
    $region43: #{tpu_custom_call.1} parent=1 // pred_check_branch
      %97 = sbr.rel (0) target = $region45
    $region44: #{tpu_custom_call.1} parent=1 // pred_region
      %99 = dma.done [#allocation6], 512
    $region45: #{tpu_custom_call.1} parent=1 // pred_fallthru
      _
    // Predicated region
    $region46: #{tpu_custom_call.1} parent=1 // pred_check
      _
    $region47: #{tpu_custom_call.1} parent=1 // pred_check_branch
      %101 = sbr.rel (0) target = $region49
    $region48: #{tpu_custom_call.1} parent=1 // pred_region
      %103 = dma.done [#allocation9], 512
    $region49: #{tpu_custom_call.1} parent=1 // pred_fallthru
      _
    // Predicated region
    $region50: #{tpu_custom_call.1} parent=1 // pred_check
      _
    $region51: #{tpu_custom_call.1} parent=1 // pred_check_branch
      %105 = sbr.rel (0) target = $region53
    $region52: #{tpu_custom_call.1} parent=1 // pred_region
      %107 = dma.done [#allocation9], 512
    $region53: #{tpu_custom_call.1} parent=1 // pred_fallthru
      _
    %v108 = vld [vmem:[#allocation2] sm:$0xff]
    %v109 = vld [vmem:[#allocation2 + $0x8] sm:$0xff]
    %v110 = vld [vmem:[#allocation7] sm:$0xff]
    %v111 = vld [vmem:[#allocation7 + $0x8] sm:$0xff]
    %v112 = vld [vmem:[#allocation7 + $0x10] sm:$0xff]
    %v113 = vld [vmem:[#allocation7 + $0x18] sm:$0xff]
    %v114 = vld [vmem:[%s3] sm:$0x1]
    %v116 = vperm.slane %v114, 0
    %vm118 = vcmask 261120
    %v120 = vsel %vm118, %v108, 0
    %v123 = vsel %vm118, %v109, 0
    %125 = vmatpush.msra.mxu0 0.0
    %126 = vmatpush.msra.mxu0 0.0
    %127 = vmatpush.msra.mxu0 0.0
    %128 = vmatpush.msra.mxu0 0.0
    %129 = vmatpush.msra.mxu0 0.0
    %130 = vmatpush.msra.mxu0 0.0
    %131 = vmatpush.msra.mxu0 0.0
    %132 = vmatpush.msra.mxu0 0.0
    %133 = vmatpush.msra.mxu0 0.0
    %134 = vmatpush.msra.mxu0 0.0
    %135 = vmatpush.msra.mxu0 0.0
    %136 = vmatpush.msra.mxu0 0.0
    %137 = vmatpush.msra.mxu0 %v113
    %138 = vmatpush.msra.mxu0 %v112
    %139 = vmatpush.msra.mxu0 %v111
    %140 = vmatpush.msra.mxu0 %v110
    %141 = vmatmul.f32.gmra.mxu0 %v120
    %v142 = vpop.f32.mrf.mxu0
    %v143 = vadd.f32 %v116, %v142
    %144 = vmatmul.f32.gmra.mxu0 %v123
    %v145 = vpop.f32.mrf.mxu0
    %v146 = vadd.f32 %v116, %v145
    %147 = vdwg.mxu0
    %v148 = vmul.f32 %v143, 0.35355338
    %v149 = vmul.f32 %v146, 0.35355338
    %v150 = vld [vmem:[#allocation8] sm:$0xff]
    %v151 = vld [vmem:[#allocation8 + $0x8] sm:$0xff]
    %v152 = vld [vmem:[#allocation8 + $0x10] sm:$0xff]
    %v153 = vld [vmem:[#allocation8 + $0x18] sm:$0xff]
    %v154 = vld [vmem:[%s5] sm:$0x1]
    %v156 = vperm.slane %v154, 0
    %158 = vmatpush.msra.mxu0 0.0
    %159 = vmatpush.msra.mxu0 0.0
    %160 = vmatpush.msra.mxu0 0.0
    %161 = vmatpush.msra.mxu0 0.0
    %162 = vmatpush.msra.mxu0 0.0
    %163 = vmatpush.msra.mxu0 0.0
    %164 = vmatpush.msra.mxu0 0.0
    %165 = vmatpush.msra.mxu0 0.0
    %166 = vmatpush.msra.mxu0 0.0
    %167 = vmatpush.msra.mxu0 0.0
    %168 = vmatpush.msra.mxu0 0.0
    %169 = vmatpush.msra.mxu0 0.0
    %170 = vmatpush.msra.mxu0 %v153
    %171 = vmatpush.msra.mxu0 %v152
    %172 = vmatpush.msra.mxu0 %v151
    %173 = vmatpush.msra.mxu0 %v150
    %174 = vmatmul.f32.gmra.mxu0 %v120
    %v175 = vpop.f32.mrf.mxu0
    %v176 = vadd.f32 %v156, %v175
    %177 = vmatmul.f32.gmra.mxu0 %v123
    %v178 = vpop.f32.mrf.mxu0
    %v179 = vadd.f32 %v156, %v178
    %180 = vdwg.mxu0
    %v181 = vld [vmem:[#allocation10] sm:$0xff]
    %v182 = vld [vmem:[#allocation10 + $0x8] sm:$0xff]
    %v183 = vld [vmem:[#allocation10 + $0x10] sm:$0xff]
    %v184 = vld [vmem:[#allocation10 + $0x18] sm:$0xff]
    %v185 = vld [vmem:[%s7] sm:$0x1]
    %v187 = vperm.slane %v185, 0
    %189 = vmatpush.msra.mxu0 0.0
    %190 = vmatpush.msra.mxu0 0.0
    %191 = vmatpush.msra.mxu0 0.0
    %192 = vmatpush.msra.mxu0 0.0
    %193 = vmatpush.msra.mxu0 0.0
    %194 = vmatpush.msra.mxu0 0.0
    %195 = vmatpush.msra.mxu0 0.0
    %196 = vmatpush.msra.mxu0 0.0
    %197 = vmatpush.msra.mxu0 0.0
    %198 = vmatpush.msra.mxu0 0.0
    %199 = vmatpush.msra.mxu0 0.0
    %200 = vmatpush.msra.mxu0 0.0
    %201 = vmatpush.msra.mxu0 %v184
    %202 = vmatpush.msra.mxu0 %v183
    %203 = vmatpush.msra.mxu0 %v182
    %204 = vmatpush.msra.mxu0 %v181
    %205 = vmatmul.f32.gmra.mxu0 %v120
    %v206 = vpop.f32.mrf.mxu0
    %v207 = vadd.f32 %v187, %v206
    %208 = vmatmul.f32.gmra.mxu0 %v123
    %v209 = vpop.f32.mrf.mxu0
    %v210 = vadd.f32 %v187, %v209
    %211 = vdwg.mxu0
    %v212 = vld [vmem:[#allocation5] sm:$0x1]
    %v213 = vld [vmem:[#allocation5 + $0x1] sm:$0x1]
    %v216 = vperm.slane %v212, 0
    %v217 = vperm.slane %v213, 0
    %vm220 = vcmask 64512
    %v222 = vsel %vm220, %v148, 0
    %v225 = vsel %vm220, %v176, 0
    %227 = vmatpush.xpose.msra.mxu0 0.0
    %228 = vmatpush.xpose.msra.mxu0 0.0
    %229 = vmatpush.xpose.msra.mxu0 0.0
    %230 = vmatpush.xpose.msra.mxu0 0.0
    %231 = vmatpush.xpose.msra.mxu0 0.0
    %232 = vmatpush.xpose.msra.mxu0 0.0
    %233 = vmatpush.xpose.msra.mxu0 0.0
    %234 = vmatpush.xpose.msra.mxu0 0.0
    %235 = vmatpush.xpose.msra.mxu0 0.0
    %236 = vmatpush.xpose.msra.mxu0 0.0
    %237 = vmatpush.xpose.msra.mxu0 0.0
    %238 = vmatpush.xpose.msra.mxu0 0.0
    %239 = vmatpush.xpose.msra.mxu0 0.0
    %240 = vmatpush.xpose.msra.mxu0 0.0
    %241 = vmatpush.xpose.msra.mxu0 0.0
    %242 = vmatpush.xpose.msra.mxu0 %v225
    %243 = vmatmul.f32.gmra.mxu0 %v222
    %v244 = vpop.f32.mrf.mxu0
    %v245 = vadd.f32 %v216, %v244
    %246 = vdwg.mxu0
    %v248 = vsel %vm220, %v149, 0
    %v251 = vsel %vm220, %v179, 0
    %253 = vmatpush.xpose.msra.mxu0 0.0
    %254 = vmatpush.xpose.msra.mxu0 0.0
    %255 = vmatpush.xpose.msra.mxu0 0.0
    %256 = vmatpush.xpose.msra.mxu0 0.0
    %257 = vmatpush.xpose.msra.mxu0 0.0
    %258 = vmatpush.xpose.msra.mxu0 0.0
    %259 = vmatpush.xpose.msra.mxu0 0.0
    %260 = vmatpush.xpose.msra.mxu0 0.0
    %261 = vmatpush.xpose.msra.mxu0 0.0
    %262 = vmatpush.xpose.msra.mxu0 0.0
    %263 = vmatpush.xpose.msra.mxu0 0.0
    %264 = vmatpush.xpose.msra.mxu0 0.0
    %265 = vmatpush.xpose.msra.mxu0 0.0
    %266 = vmatpush.xpose.msra.mxu0 0.0
    %267 = vmatpush.xpose.msra.mxu0 0.0
    %268 = vmatpush.xpose.msra.mxu0 %v251
    %269 = vmatmul.f32.gmra.mxu0 %v248
    %v270 = vpop.f32.mrf.mxu0
    %v271 = vadd.f32 %v217, %v270
    %272 = vdwg.mxu0
    %v273 = vsel %vm220, %v245, -inf
    %274 = vmax.xlane.f32.xlu0 %v273
    %v275 = vpop.xlane.xlu0 %274
    %v276 = vsel %vm220, %v271, -inf
    %277 = vmax.xlane.f32.xlu0 %v276
    %v278 = vpop.xlane.xlu0 %277
    %v279 = vsub.f32 %v245, %v275
    %v280 = vsub.f32 %v271, %v278
    %v281 = vmul.f32 %v279, 1.442695
    %v282 = vpow.pop %v281
    %v283 = vmul.f32 %v280, 1.442695
    %v284 = vpow.pop %v283
    %v285 = vsel %vm220, %v282, 0.0
    %286 = vadd.xlane.f32.xlu0 %v285
    %v287 = vpop.xlane.xlu0 %286
    %v288 = vsel %vm220, %v284, 0.0
    %289 = vadd.xlane.f32.xlu0 %v288
    %v290 = vpop.xlane.xlu0 %289
    %v291 = vrcp.pop %v287
    %v292 = vrcp.pop %v290
    %v293 = vmul.f32 %v282, %v291
    %v294 = vmul.f32 %v284, %v292
    %v296 = vsel %vm220, %v293, 0
    %298 = vmatpush.msra.mxu0 0.0
    %299 = vmatpush.msra.mxu0 0.0
    %300 = vmatpush.msra.mxu0 0.0
    %301 = vmatpush.msra.mxu0 0.0
    %302 = vmatpush.msra.mxu0 0.0
    %303 = vmatpush.msra.mxu0 0.0
    %304 = vmatpush.msra.mxu0 0.0
    %305 = vmatpush.msra.mxu0 0.0
    %306 = vmatpush.msra.mxu0 0.0
    %307 = vmatpush.msra.mxu0 0.0
    %308 = vmatpush.msra.mxu0 0.0
    %309 = vmatpush.msra.mxu0 0.0
    %310 = vmatpush.msra.mxu0 0.0
    %311 = vmatpush.msra.mxu0 0.0
    %312 = vmatpush.msra.mxu0 0.0
    %313 = vmatpush.msra.mxu0 %v207
    %314 = vmatmul.f32.gmra.mxu0 %v296
    %v315 = vpop.f32.mrf.mxu0
    %v316 = vadd.f32 0.0, %v315
    %317 = vdwg.mxu0
    %v319 = vsel %vm220, %v294, 0
    %321 = vmatpush.msra.mxu0 0.0
    %322 = vmatpush.msra.mxu0 0.0
    %323 = vmatpush.msra.mxu0 0.0
    %324 = vmatpush.msra.mxu0 0.0
    %325 = vmatpush.msra.mxu0 0.0
    %326 = vmatpush.msra.mxu0 0.0
    %327 = vmatpush.msra.mxu0 0.0
    %328 = vmatpush.msra.mxu0 0.0
    %329 = vmatpush.msra.mxu0 0.0
    %330 = vmatpush.msra.mxu0 0.0
    %331 = vmatpush.msra.mxu0 0.0
    %332 = vmatpush.msra.mxu0 0.0
    %333 = vmatpush.msra.mxu0 0.0
    %334 = vmatpush.msra.mxu0 0.0
    %335 = vmatpush.msra.mxu0 0.0
    %336 = vmatpush.msra.mxu0 %v210
    %337 = vmatmul.f32.gmra.mxu0 %v319
    %v338 = vpop.f32.mrf.mxu0
    %v339 = vadd.f32 0.0, %v338
    %340 = vdwg.mxu0
    %341 = vrot.lane.b32.xlu0 %v148, 120
    %v342 = vpop.permute.xlu0 %341
    %343 = vrot.lane.b32.xlu0 %v176, 120
    %v344 = vpop.permute.xlu0 %343
    %v345 = vsel %vm220, %v342, 0
    %v347 = vsel %vm220, %v344, 0
    %349 = vmatpush.xpose.msra.mxu0 0.0
    %350 = vmatpush.xpose.msra.mxu0 0.0
    %351 = vmatpush.xpose.msra.mxu0 0.0
    %352 = vmatpush.xpose.msra.mxu0 0.0
    %353 = vmatpush.xpose.msra.mxu0 0.0
    %354 = vmatpush.xpose.msra.mxu0 0.0
    %355 = vmatpush.xpose.msra.mxu0 0.0
    %356 = vmatpush.xpose.msra.mxu0 0.0
    %357 = vmatpush.xpose.msra.mxu0 0.0
    %358 = vmatpush.xpose.msra.mxu0 0.0
    %359 = vmatpush.xpose.msra.mxu0 0.0
    %360 = vmatpush.xpose.msra.mxu0 0.0
    %361 = vmatpush.xpose.msra.mxu0 0.0
    %362 = vmatpush.xpose.msra.mxu0 0.0
    %363 = vmatpush.xpose.msra.mxu0 0.0
    %364 = vmatpush.xpose.msra.mxu0 %v347
    %365 = vmatmul.f32.gmra.mxu0 %v345
    %v366 = vpop.f32.mrf.mxu0
    %v367 = vadd.f32 %v216, %v366
    %368 = vdwg.mxu0
    %369 = vrot.lane.b32.xlu0 %v149, 120
    %v370 = vpop.permute.xlu0 %369
    %371 = vrot.lane.b32.xlu0 %v179, 120
    %v372 = vpop.permute.xlu0 %371
    %v373 = vsel %vm220, %v370, 0
    %v375 = vsel %vm220, %v372, 0
    %377 = vmatpush.xpose.msra.mxu0 0.0
    %378 = vmatpush.xpose.msra.mxu0 0.0
    %379 = vmatpush.xpose.msra.mxu0 0.0
    %380 = vmatpush.xpose.msra.mxu0 0.0
    %381 = vmatpush.xpose.msra.mxu0 0.0
    %382 = vmatpush.xpose.msra.mxu0 0.0
    %383 = vmatpush.xpose.msra.mxu0 0.0
    %384 = vmatpush.xpose.msra.mxu0 0.0
    %385 = vmatpush.xpose.msra.mxu0 0.0
    %386 = vmatpush.xpose.msra.mxu0 0.0
    %387 = vmatpush.xpose.msra.mxu0 0.0
    %388 = vmatpush.xpose.msra.mxu0 0.0
    %389 = vmatpush.xpose.msra.mxu0 0.0
    %390 = vmatpush.xpose.msra.mxu0 0.0
    %391 = vmatpush.xpose.msra.mxu0 0.0
    %392 = vmatpush.xpose.msra.mxu0 %v375
    %393 = vmatmul.f32.gmra.mxu0 %v373
    %v394 = vpop.f32.mrf.mxu0
    %v395 = vadd.f32 %v217, %v394
    %396 = vdwg.mxu0
    %v397 = vsel %vm220, %v367, -inf
    %398 = vmax.xlane.f32.xlu0 %v397
    %v399 = vpop.xlane.xlu0 %398
    %v400 = vsel %vm220, %v395, -inf
    %401 = vmax.xlane.f32.xlu0 %v400
    %v402 = vpop.xlane.xlu0 %401
    %v403 = vsub.f32 %v367, %v399
    %v404 = vsub.f32 %v395, %v402
    %v405 = vmul.f32 %v403, 1.442695
    %v406 = vpow.pop %v405
    %v407 = vmul.f32 %v404, 1.442695
    %v408 = vpow.pop %v407
    %v409 = vsel %vm220, %v406, 0.0
    %410 = vadd.xlane.f32.xlu0 %v409
    %v411 = vpop.xlane.xlu0 %410
    %v412 = vsel %vm220, %v408, 0.0
    %413 = vadd.xlane.f32.xlu0 %v412
    %v414 = vpop.xlane.xlu0 %413
    %v415 = vrcp.pop %v411
    %v416 = vrcp.pop %v414
    %v417 = vmul.f32 %v406, %v415
    %v418 = vmul.f32 %v408, %v416
    %420 = vrot.lane.b32.xlu0 %v207, 120
    %v421 = vpop.permute.xlu0 %420
    %v424 = vsel %vm220, %v417, 0
    %426 = vmatpush.msra.mxu0 0.0
    %427 = vmatpush.msra.mxu0 0.0
    %428 = vmatpush.msra.mxu0 0.0
    %429 = vmatpush.msra.mxu0 0.0
    %430 = vmatpush.msra.mxu0 0.0
    %431 = vmatpush.msra.mxu0 0.0
    %432 = vmatpush.msra.mxu0 0.0
    %433 = vmatpush.msra.mxu0 0.0
    %434 = vmatpush.msra.mxu0 0.0
    %435 = vmatpush.msra.mxu0 0.0
    %436 = vmatpush.msra.mxu0 0.0
    %437 = vmatpush.msra.mxu0 0.0
    %438 = vmatpush.msra.mxu0 0.0
    %439 = vmatpush.msra.mxu0 0.0
    %440 = vmatpush.msra.mxu0 0.0
    %441 = vmatpush.msra.mxu0 %v421
    %442 = vmatmul.f32.gmra.mxu0 %v424
    %v443 = vpop.f32.mrf.mxu0
    %v444 = vadd.f32 0.0, %v443
    %445 = vdwg.mxu0
    %447 = vrot.lane.b32.xlu0 %v210, 120
    %v448 = vpop.permute.xlu0 %447
    %v451 = vsel %vm220, %v418, 0
    %453 = vmatpush.msra.mxu0 0.0
    %454 = vmatpush.msra.mxu0 0.0
    %455 = vmatpush.msra.mxu0 0.0
    %456 = vmatpush.msra.mxu0 0.0
    %457 = vmatpush.msra.mxu0 0.0
    %458 = vmatpush.msra.mxu0 0.0
    %459 = vmatpush.msra.mxu0 0.0
    %460 = vmatpush.msra.mxu0 0.0
    %461 = vmatpush.msra.mxu0 0.0
    %462 = vmatpush.msra.mxu0 0.0
    %463 = vmatpush.msra.mxu0 0.0
    %464 = vmatpush.msra.mxu0 0.0
    %465 = vmatpush.msra.mxu0 0.0
    %466 = vmatpush.msra.mxu0 0.0
    %467 = vmatpush.msra.mxu0 0.0
    %468 = vmatpush.msra.mxu0 %v448
    %469 = vmatmul.f32.gmra.mxu0 %v451
    %v470 = vpop.f32.mrf.mxu0
    %v471 = vadd.f32 0.0, %v470
    %472 = vdwg.mxu0
    %473 = vrot.lane.b32.xlu0 %v148, 112
    %v474 = vpop.permute.xlu0 %473
    %475 = vrot.lane.b32.xlu0 %v176, 112
    %v476 = vpop.permute.xlu0 %475
    %v477 = vsel %vm220, %v474, 0
    %v479 = vsel %vm220, %v476, 0
    %481 = vmatpush.xpose.msra.mxu0 0.0
    %482 = vmatpush.xpose.msra.mxu0 0.0
    %483 = vmatpush.xpose.msra.mxu0 0.0
    %484 = vmatpush.xpose.msra.mxu0 0.0
    %485 = vmatpush.xpose.msra.mxu0 0.0
    %486 = vmatpush.xpose.msra.mxu0 0.0
    %487 = vmatpush.xpose.msra.mxu0 0.0
    %488 = vmatpush.xpose.msra.mxu0 0.0
    %489 = vmatpush.xpose.msra.mxu0 0.0
    %490 = vmatpush.xpose.msra.mxu0 0.0
    %491 = vmatpush.xpose.msra.mxu0 0.0
    %492 = vmatpush.xpose.msra.mxu0 0.0
    %493 = vmatpush.xpose.msra.mxu0 0.0
    %494 = vmatpush.xpose.msra.mxu0 0.0
    %495 = vmatpush.xpose.msra.mxu0 0.0
    %496 = vmatpush.xpose.msra.mxu0 %v479
    %497 = vmatmul.f32.gmra.mxu0 %v477
    %v498 = vpop.f32.mrf.mxu0
    %v499 = vadd.f32 %v216, %v498
    %500 = vdwg.mxu0
    %501 = vrot.lane.b32.xlu0 %v149, 112
    %v502 = vpop.permute.xlu0 %501
    %503 = vrot.lane.b32.xlu0 %v179, 112
    %v504 = vpop.permute.xlu0 %503
    %v505 = vsel %vm220, %v502, 0
    %v507 = vsel %vm220, %v504, 0
    %509 = vmatpush.xpose.msra.mxu0 0.0
    %510 = vmatpush.xpose.msra.mxu0 0.0
    %511 = vmatpush.xpose.msra.mxu0 0.0
    %512 = vmatpush.xpose.msra.mxu0 0.0
    %513 = vmatpush.xpose.msra.mxu0 0.0
    %514 = vmatpush.xpose.msra.mxu0 0.0
    %515 = vmatpush.xpose.msra.mxu0 0.0
    %516 = vmatpush.xpose.msra.mxu0 0.0
    %517 = vmatpush.xpose.msra.mxu0 0.0
    %518 = vmatpush.xpose.msra.mxu0 0.0
    %519 = vmatpush.xpose.msra.mxu0 0.0
    %520 = vmatpush.xpose.msra.mxu0 0.0
    %521 = vmatpush.xpose.msra.mxu0 0.0
    %522 = vmatpush.xpose.msra.mxu0 0.0
    %523 = vmatpush.xpose.msra.mxu0 0.0
    %524 = vmatpush.xpose.msra.mxu0 %v507
    %525 = vmatmul.f32.gmra.mxu0 %v505
    %v526 = vpop.f32.mrf.mxu0
    %v527 = vadd.f32 %v217, %v526
    %528 = vdwg.mxu0
    %v529 = vsel %vm220, %v499, -inf
    %530 = vmax.xlane.f32.xlu0 %v529
    %v531 = vpop.xlane.xlu0 %530
    %v532 = vsel %vm220, %v527, -inf
    %533 = vmax.xlane.f32.xlu0 %v532
    %v534 = vpop.xlane.xlu0 %533
    %v535 = vsub.f32 %v499, %v531
    %v536 = vsub.f32 %v527, %v534
    %v537 = vmul.f32 %v535, 1.442695
    %v538 = vpow.pop %v537
    %v539 = vmul.f32 %v536, 1.442695
    %v540 = vpow.pop %v539
    %v541 = vsel %vm220, %v538, 0.0
    %542 = vadd.xlane.f32.xlu0 %v541
    %v543 = vpop.xlane.xlu0 %542
    %v544 = vsel %vm220, %v540, 0.0
    %545 = vadd.xlane.f32.xlu0 %v544
    %v546 = vpop.xlane.xlu0 %545
    %v547 = vrcp.pop %v543
    %v548 = vrcp.pop %v546
    %v549 = vmul.f32 %v538, %v547
    %v550 = vmul.f32 %v540, %v548
    %551 = vrot.lane.b32.xlu0 %v207, 112
    %v552 = vpop.permute.xlu0 %551
    %v555 = vsel %vm220, %v549, 0
    %557 = vmatpush.msra.mxu0 0.0
    %558 = vmatpush.msra.mxu0 0.0
    %559 = vmatpush.msra.mxu0 0.0
    %560 = vmatpush.msra.mxu0 0.0
    %561 = vmatpush.msra.mxu0 0.0
    %562 = vmatpush.msra.mxu0 0.0
    %563 = vmatpush.msra.mxu0 0.0
    %564 = vmatpush.msra.mxu0 0.0
    %565 = vmatpush.msra.mxu0 0.0
    %566 = vmatpush.msra.mxu0 0.0
    %567 = vmatpush.msra.mxu0 0.0
    %568 = vmatpush.msra.mxu0 0.0
    %569 = vmatpush.msra.mxu0 0.0
    %570 = vmatpush.msra.mxu0 0.0
    %571 = vmatpush.msra.mxu0 0.0
    %572 = vmatpush.msra.mxu0 %v552
    %573 = vmatmul.f32.gmra.mxu0 %v555
    %v574 = vpop.f32.mrf.mxu0
    %v575 = vadd.f32 0.0, %v574
    %576 = vdwg.mxu0
    %577 = vrot.lane.b32.xlu0 %v210, 112
    %v578 = vpop.permute.xlu0 %577
    %v581 = vsel %vm220, %v550, 0
    %583 = vmatpush.msra.mxu0 0.0
    %584 = vmatpush.msra.mxu0 0.0
    %585 = vmatpush.msra.mxu0 0.0
    %586 = vmatpush.msra.mxu0 0.0
    %587 = vmatpush.msra.mxu0 0.0
    %588 = vmatpush.msra.mxu0 0.0
    %589 = vmatpush.msra.mxu0 0.0
    %590 = vmatpush.msra.mxu0 0.0
    %591 = vmatpush.msra.mxu0 0.0
    %592 = vmatpush.msra.mxu0 0.0
    %593 = vmatpush.msra.mxu0 0.0
    %594 = vmatpush.msra.mxu0 0.0
    %595 = vmatpush.msra.mxu0 0.0
    %596 = vmatpush.msra.mxu0 0.0
    %597 = vmatpush.msra.mxu0 0.0
    %598 = vmatpush.msra.mxu0 %v578
    %599 = vmatmul.f32.gmra.mxu0 %v581
    %v600 = vpop.f32.mrf.mxu0
    %v601 = vadd.f32 0.0, %v600
    %602 = vdwg.mxu0
    %603 = vrot.lane.b32.xlu0 %v148, 104
    %v604 = vpop.permute.xlu0 %603
    %605 = vrot.lane.b32.xlu0 %v176, 104
    %v606 = vpop.permute.xlu0 %605
    %v607 = vsel %vm220, %v604, 0
    %v609 = vsel %vm220, %v606, 0
    %611 = vmatpush.xpose.msra.mxu0 0.0
    %612 = vmatpush.xpose.msra.mxu0 0.0
    %613 = vmatpush.xpose.msra.mxu0 0.0
    %614 = vmatpush.xpose.msra.mxu0 0.0
    %615 = vmatpush.xpose.msra.mxu0 0.0
    %616 = vmatpush.xpose.msra.mxu0 0.0
    %617 = vmatpush.xpose.msra.mxu0 0.0
    %618 = vmatpush.xpose.msra.mxu0 0.0
    %619 = vmatpush.xpose.msra.mxu0 0.0
    %620 = vmatpush.xpose.msra.mxu0 0.0
    %621 = vmatpush.xpose.msra.mxu0 0.0
    %622 = vmatpush.xpose.msra.mxu0 0.0
    %623 = vmatpush.xpose.msra.mxu0 0.0
    %624 = vmatpush.xpose.msra.mxu0 0.0
    %625 = vmatpush.xpose.msra.mxu0 0.0
    %626 = vmatpush.xpose.msra.mxu0 %v609
    %627 = vmatmul.f32.gmra.mxu0 %v607
    %v628 = vpop.f32.mrf.mxu0
    %v629 = vadd.f32 %v216, %v628
    %630 = vdwg.mxu0
    %631 = vrot.lane.b32.xlu0 %v149, 104
    %v632 = vpop.permute.xlu0 %631
    %633 = vrot.lane.b32.xlu0 %v179, 104
    %v634 = vpop.permute.xlu0 %633
    %v635 = vsel %vm220, %v632, 0
    %v637 = vsel %vm220, %v634, 0
    %639 = vmatpush.xpose.msra.mxu0 0.0
    %640 = vmatpush.xpose.msra.mxu0 0.0
    %641 = vmatpush.xpose.msra.mxu0 0.0
    %642 = vmatpush.xpose.msra.mxu0 0.0
    %643 = vmatpush.xpose.msra.mxu0 0.0
    %644 = vmatpush.xpose.msra.mxu0 0.0
    %645 = vmatpush.xpose.msra.mxu0 0.0
    %646 = vmatpush.xpose.msra.mxu0 0.0
    %647 = vmatpush.xpose.msra.mxu0 0.0
    %648 = vmatpush.xpose.msra.mxu0 0.0
    %649 = vmatpush.xpose.msra.mxu0 0.0
    %650 = vmatpush.xpose.msra.mxu0 0.0
    %651 = vmatpush.xpose.msra.mxu0 0.0
    %652 = vmatpush.xpose.msra.mxu0 0.0
    %653 = vmatpush.xpose.msra.mxu0 0.0
    %654 = vmatpush.xpose.msra.mxu0 %v637
    %655 = vmatmul.f32.gmra.mxu0 %v635
    %v656 = vpop.f32.mrf.mxu0
    %v657 = vadd.f32 %v217, %v656
    %658 = vdwg.mxu0
    %v659 = vsel %vm220, %v629, -inf
    %660 = vmax.xlane.f32.xlu0 %v659
    %v661 = vpop.xlane.xlu0 %660
    %v662 = vsel %vm220, %v657, -inf
    %663 = vmax.xlane.f32.xlu0 %v662
    %v664 = vpop.xlane.xlu0 %663
    %v665 = vsub.f32 %v629, %v661
    %v666 = vsub.f32 %v657, %v664
    %v667 = vmul.f32 %v665, 1.442695
    %v668 = vpow.pop %v667
    %v669 = vmul.f32 %v666, 1.442695
    %v670 = vpow.pop %v669
    %v671 = vsel %vm220, %v668, 0.0
    %672 = vadd.xlane.f32.xlu0 %v671
    %v673 = vpop.xlane.xlu0 %672
    %v674 = vsel %vm220, %v670, 0.0
    %675 = vadd.xlane.f32.xlu0 %v674
    %v676 = vpop.xlane.xlu0 %675
    %v677 = vrcp.pop %v673
    %v678 = vrcp.pop %v676
    %v679 = vmul.f32 %v668, %v677
    %v680 = vmul.f32 %v670, %v678
    %681 = vrot.lane.b32.xlu0 %v207, 104
    %v682 = vpop.permute.xlu0 %681
    %v685 = vsel %vm220, %v679, 0
    %687 = vmatpush.msra.mxu0 0.0
    %688 = vmatpush.msra.mxu0 0.0
    %689 = vmatpush.msra.mxu0 0.0
    %690 = vmatpush.msra.mxu0 0.0
    %691 = vmatpush.msra.mxu0 0.0
    %692 = vmatpush.msra.mxu0 0.0
    %693 = vmatpush.msra.mxu0 0.0
    %694 = vmatpush.msra.mxu0 0.0
    %695 = vmatpush.msra.mxu0 0.0
    %696 = vmatpush.msra.mxu0 0.0
    %697 = vmatpush.msra.mxu0 0.0
    %698 = vmatpush.msra.mxu0 0.0
    %699 = vmatpush.msra.mxu0 0.0
    %700 = vmatpush.msra.mxu0 0.0
    %701 = vmatpush.msra.mxu0 0.0
    %702 = vmatpush.msra.mxu0 %v682
    %703 = vmatmul.f32.gmra.mxu0 %v685
    %v704 = vpop.f32.mrf.mxu0
    %v705 = vadd.f32 0.0, %v704
    %706 = vdwg.mxu0
    %707 = vrot.lane.b32.xlu0 %v210, 104
    %v708 = vpop.permute.xlu0 %707
    %v711 = vsel %vm220, %v680, 0
    %713 = vmatpush.msra.mxu0 0.0
    %714 = vmatpush.msra.mxu0 0.0
    %715 = vmatpush.msra.mxu0 0.0
    %716 = vmatpush.msra.mxu0 0.0
    %717 = vmatpush.msra.mxu0 0.0
    %718 = vmatpush.msra.mxu0 0.0
    %719 = vmatpush.msra.mxu0 0.0
    %720 = vmatpush.msra.mxu0 0.0
    %721 = vmatpush.msra.mxu0 0.0
    %722 = vmatpush.msra.mxu0 0.0
    %723 = vmatpush.msra.mxu0 0.0
    %724 = vmatpush.msra.mxu0 0.0
    %725 = vmatpush.msra.mxu0 0.0
    %726 = vmatpush.msra.mxu0 0.0
    %727 = vmatpush.msra.mxu0 0.0
    %728 = vmatpush.msra.mxu0 %v708
    %729 = vmatmul.f32.gmra.mxu0 %v711
    %v730 = vpop.f32.mrf.mxu0
    %v731 = vadd.f32 0.0, %v730
    %732 = vdwg.mxu0
    %735 = vrot.lane.b32.xlu0 %v444, 8
    %v736 = vpop.permute.xlu0 %735
    %737 = vrot.lane.b32.xlu0 %v471, 8
    %v738 = vpop.permute.xlu0 %737
    %743 = vrot.lane.b32.xlu0 %v575, 16
    %v744 = vpop.permute.xlu0 %743
    %745 = vrot.lane.b32.xlu0 %v601, 16
    %v746 = vpop.permute.xlu0 %745
    %751 = vrot.lane.b32.xlu0 %v705, 24
    %v752 = vpop.permute.xlu0 %751
    %753 = vrot.lane.b32.xlu0 %v731, 24
    %v754 = vpop.permute.xlu0 %753
    %v757 = vsel %vm220, %v316, %v736
    %v758 = vsel %vm220, %v339, %v738
    %vm759 = vcmask 130048
    %v760 = vsel %vm759, %v757, %v744
    %v761 = vsel %vm759, %v758, %v746
    %vm762 = vcmask 195584
    %v763 = vsel %vm762, %v760, %v752
    %v764 = vsel %vm762, %v761, %v754
    %765 = vst.msk [vmem:[#allocation11] sm:$0xff] %vm118, %v763
    %766 = vst.msk [vmem:[#allocation11 + $0x8] sm:$0xff] %vm118, %v764
    // Predicated region
    $region54: #{tpu_custom_call.1} parent=1 // pred_check
      _
    $region55: #{tpu_custom_call.1} parent=1 // pred_check_branch
      %768 = sbr.rel (0) target = $region57
    $region56: #{tpu_custom_call.1} parent=1 // pred_region
      %770 = vsyncadd [#allocation4], 0
      %s771 = sshll.u32 [#allocation11], 4
      %s772 = int_to_ptr.vmem [resolvable:$true] %s771
      %s773 = sshll.u32 %s8, 4
      %s774 = int_to_ptr.hbm [resolvable:$true] %s773
      %779 = dma.vmem_to_hbm [thread:$0]  %s772, 256, %s774, [#allocation4], 128, 128, 8
    $region57: #{tpu_custom_call.1} parent=1 // pred_fallthru
      _
    // Predicated region
    $region58: #{tpu_custom_call.1} parent=1 // pred_check
      _
    $region59: #{tpu_custom_call.1} parent=1 // pred_check_branch
      %781 = sbr.rel (0) target = $region61
    $region60: #{tpu_custom_call.1} parent=1 // pred_region
      %783 = dma.done [#allocation4], 256
    $region61: #{tpu_custom_call.1} parent=1 // pred_fallthru
      _
    %784 = vsyncpa [#allocation3], 1
    %785 = vsyncpa [#allocation6], 1
    %786 = vsyncpa [#allocation9], 1
    %787 = vsyncpa [#allocation4], 1

</llo_original>
